<compile_context>
chip_gen: v7x
topology: tpu7x:2x2x1
jax: 0.10.0
libtpu: 0.0.40
codegen_flags: <defaults>
</compile_context>

<pallas_src>
import functools

import jax
import jax.numpy as jnp
from jax.experimental import pallas as pl
from jax.experimental.pallas import tpu as pltpu


def _round_up(a, m):
    return (a + m - 1) // m * m


def _cdiv(a, b):
    return (a + b - 1) // b


def _vmem_ceiling_bytes():
    """Generation-aware VMEM budget (per TensorCore)."""
    cap = 128 << 20
    try:
        info = pltpu.get_tpu_info()
        cap = int(getattr(info, "vmem_capacity_bytes", cap))
    except Exception:
        pass
    # v7x: 64 MiB/TC -> keep headroom; v5e/v6e: 128 MiB -> use most of it.
    return (52 << 20) if cap <= (64 << 20) else (100 << 20)


# ---------------------------------------------------------------------------
# Kernels
# ---------------------------------------------------------------------------
def _proj_kernel_resident(x_ref, w_ref, b_ref, o_ref):
    """Weight fully VMEM-resident (constant block index): one dot per M tile."""
    x = x_ref[...].astype(jnp.bfloat16)          # in-kernel cast, no extra HBM pass
    acc = jnp.dot(x, w_ref[...], preferred_element_type=jnp.float32)
    o_ref[...] = (acc + b_ref[...]).astype(o_ref.dtype)


def _proj_kernel_ksplit(x_ref, w_ref, b_ref, o_ref, acc_ref):
    """Fallback for oversized weights: K split on grid axis 2, fp32 scratch acc."""
    k = pl.program_id(2)

    @pl.when(k == 0)
    def _():
        acc_ref[...] = jnp.zeros_like(acc_ref)

    acc_ref[...] += jnp.dot(
        x_ref[...].astype(jnp.bfloat16), w_ref[...],
        preferred_element_type=jnp.float32)

    @pl.when(k == pl.num_programs(2) - 1)
    def _():
        o_ref[...] = (acc_ref[...] + b_ref[...]).astype(o_ref.dtype)


# ---------------------------------------------------------------------------
# Wrapper
# ---------------------------------------------------------------------------
@functools.partial(jax.jit, static_argnames=("tm", "out_dtype"))
def vision_proj(x, w_km, b, *, tm=256, out_dtype=None):
    """y = x @ w_km + b.

    x:    [B, P, K]  (any float dtype; tiles are cast to bf16 inside the kernel)
    w_km: [K, N]     (PyTorch weight [N, K] transposed ONCE at load time)
    b:    [N]
    returns [B, P, N] in `out_dtype` (default: x.dtype).
    """
    B, P, K = x.shape
    K2, N = w_km.shape
    assert K == K2, "weight must be K-major: [ve_dim, lm_dim]"
    M = B * P
    out_dtype = jnp.dtype(out_dtype if out_dtype is not None else x.dtype)
    x_bytes = jnp.dtype(x.dtype).itemsize
    o_bytes = out_dtype.itemsize

    # ---- M tiling: bounded tm; >=2 blocks when possible (v7x megacore) -----
    tm = max(16, min(int(tm), _round_up(M, 16)))
    tm = _round_up(tm, 16)
    if M >= 32 and _round_up(M, tm) // tm < 2:
        tm = _round_up((M + 1) // 2, 16)
    M_pad = _round_up(M, tm)

    K_pad = _round_up(K, 128)
    N_pad = _round_up(N, 128)

    vmem_ceiling = _vmem_ceiling_bytes()

    # ---- weight-resident decision (typical vision-proj weights: 1-20 MiB) --
    resident_bytes = (
        2 * K_pad * N_pad * 2          # bf16 weight (pipeline double-buffers)
        + 2 * N_pad * 4                # fp32 bias
        + 2 * tm * K_pad * x_bytes     # x tiles (original dtype)
        + 2 * tm * N_pad * o_bytes     # output tiles
    )
    use_resident = resident_bytes <= int(0.85 * vmem_ceiling)

    # Weight / bias prep is cheap (static, few MiB); ideally done once at load.
    x2d = x.reshape(M, K)
    w2d = w_km.astype(jnp.bfloat16)
    b2d = b.astype(jnp.float32).reshape(1, N)

    flops = 2 * M_pad * K_pad * N_pad
    ideal_bytes = M * K * x_bytes + K * N * 2 + N * 4 + M * N * o_bytes
    cost = pl.CostEstimate(flops=flops, transcendentals=0,
                           bytes_accessed=ideal_bytes)

    if use_resident:
        # ------ Path A: grid (M blocks,), W/bias index constant -> DMA'd once
        if (M_pad, K_pad) != (M, K):
            x2d = jnp.pad(x2d, ((0, M_pad - M), (0, K_pad - K)))
        if (K_pad, N_pad) != (K, N):
            w2d = jnp.pad(w2d, ((0, K_pad - K), (0, N_pad - N)))
        if N_pad != N:
            b2d = jnp.pad(b2d, ((0, 0), (0, N_pad - N)))

        vmem_limit = int(min(vmem_ceiling,
                             max(32 << 20, resident_bytes + (4 << 20))))
        out2d = pl.pallas_call(
            _proj_kernel_resident,
            out_shape=jax.ShapeDtypeStruct((M_pad, N_pad), out_dtype),
            grid_spec=pltpu.PrefetchScalarGridSpec(
                num_scalar_prefetch=0,
                grid=(M_pad // tm,),
                in_specs=[
                    pl.BlockSpec((tm, K_pad), lambda i: (i, 0)),      # x tile
                    pl.BlockSpec((K_pad, N_pad), lambda i: (0, 0)),   # W resident
                    pl.BlockSpec((1, N_pad), lambda i: (0, 0)),       # bias
                ],
                out_specs=pl.BlockSpec((tm, N_pad), lambda i: (i, 0)),
            ),
            compiler_params=pltpu.CompilerParams(
                dimension_semantics=("parallel",),
                vmem_limit_bytes=vmem_limit,
            ),
            cost_estimate=cost,
        )(x2d, w2d, b2d)
    else:
        # ------ Path B: standard (M, N, K) tiled GEMM with fp32 accumulator -
        nn_blocks = _cdiv(N_pad, 512)
        tn = _round_up(_cdiv(N_pad, nn_blocks), 128)
        N_padB = nn_blocks * tn
        nk_blocks = _cdiv(K_pad, 2048)
        tk = _round_up(_cdiv(K_pad, nk_blocks), 128)
        K_padB = nk_blocks * tk

        if (M_pad, K_padB) != (M, K):
            x2d = jnp.pad(x2d, ((0, M_pad - M), (0, K_padB - K)))
        if (K_padB, N_padB) != (K, N):
            w2d = jnp.pad(w2d, ((0, K_padB - K), (0, N_padB - N)))
        if N_padB != N:
            b2d = jnp.pad(b2d, ((0, 0), (0, N_padB - N)))

        tile_bytes = (2 * tm * tk * x_bytes + 2 * tk * tn * 2 + 2 * tn * 4
                      + 2 * tm * tn * o_bytes + tm * tn * 4)
        vmem_limit = int(min(vmem_ceiling,
                             max(32 << 20, 2 * tile_bytes + (8 << 20))))
        out2d = pl.pallas_call(
            _proj_kernel_ksplit,
            out_shape=jax.ShapeDtypeStruct((M_pad, N_padB), out_dtype),
            grid_spec=pltpu.PrefetchScalarGridSpec(
                num_scalar_prefetch=0,
                grid=(M_pad // tm, N_padB // tn, K_padB // tk),
                in_specs=[
                    pl.BlockSpec((tm, tk), lambda i, j, k: (i, k)),
                    pl.BlockSpec((tk, tn), lambda i, j, k: (k, j)),
                    pl.BlockSpec((1, tn), lambda i, j, k: (0, j)),
                ],
                out_specs=pl.BlockSpec((tm, tn), lambda i, j, k: (i, j)),
                scratch_shapes=[pltpu.VMEM((tm, tn), jnp.float32)],
            ),
            compiler_params=pltpu.CompilerParams(
                dimension_semantics=("parallel", "parallel", "arbitrary"),
                vmem_limit_bytes=vmem_limit,
            ),
            cost_estimate=cost,
        )(x2d, w2d, b2d)

    return out2d[:M, :N].reshape(B, P, N)


if __name__ == "__main__":
    key = jax.random.PRNGKey(0)
    kx, kw, kb, kx2, kw2, kb2, kx3, kw3, kb3 = jax.random.split(key, 9)

    # --- primary small-shape test (aligned dims) ---------------------------
    B, num_patches, ve_dim, lm_dim = 2, 8, 256, 128
    x = jax.random.normal(kx, (B, num_patches, ve_dim), dtype=jnp.float32)
    bound = 1.0 / (ve_dim ** 0.5)
    w_pt = jax.random.uniform(kw, (lm_dim, ve_dim), jnp.float32, -bound, bound)
    b_pt = jax.random.uniform(kb, (lm_dim,), jnp.float32, -bound, bound)
    w_km = jnp.asarray(w_pt.T)  # pre-transpose once at load time

    out = vision_proj(x, w_km, b_pt)
    jax.block_until_ready(out)
    ref = jnp.einsum("bpk,kn->bpn", x, w_km) + b_pt[None, None, :]
    assert out.shape == (B, num_patches, lm_dim)
    assert jnp.allclose(out, ref, atol=2e-2, rtol=2e-2)  # bf16 MXU, fp32 accum

    # --- unaligned-shape test (exercises the padding path) -----------------
    B2, P2, K2d, N2d = 2, 9, 200, 136
    x2 = jax.random.normal(kx2, (B2, P2, K2d), dtype=jnp.float32)
    bound2 = 1.0 / (K2d ** 0.5)
    w_pt2 = jax.random.uniform(kw2, (N2d, K2d), jnp.float32, -bound2, bound2)
    b_pt2 = jax.random.uniform(kb2, (N2d,), jnp.float32, -bound2, bound2)
    out2 = vision_proj(x2, jnp.asarray(w_pt2.T), b_pt2)
    jax.block_until_ready(out2)
    ref2 = jnp.einsum("bpk,kn->bpn", x2, w_pt2.T) + b_pt2[None, None, :]
    assert out2.shape == (B2, P2, N2d)
    assert jnp.allclose(out2, ref2, atol=2e-2, rtol=2e-2)

    # --- module-default dims, multi-block M (exercises >=2 parallel blocks) -
    B3, P3, K3d, N3d = 4, 64, 768, 512
    x3 = jax.random.normal(kx3, (B3, P3, K3d), dtype=jnp.float32)
    bound3 = 1.0 / (K3d ** 0.5)
    w_pt3 = jax.random.uniform(kw3, (N3d, K3d), jnp.float32, -bound3, bound3)
    b_pt3 = jax.random.uniform(kb3, (N3d,), jnp.float32, -bound3, bound3)
    out3 = vision_proj(x3, jnp.asarray(w_pt3.T), b_pt3)
    jax.block_until_ready(out3)
    ref3 = jnp.einsum("bpk,kn->bpn", x3, w_pt3.T) + b_pt3[None, None, :]
    assert out3.shape == (B3, P3, N3d)
    assert jnp.allclose(out3, ref3, atol=3e-2, rtol=3e-2)

    print("KERNEL_OK")
</pallas_src>

<mosaic_0001>
module attributes {stable_mosaic.version = 11 : i64} {
  func.func @_proj_kernel_resident(%arg0: i32, %arg1: memref<16x256xf32, #tpu.memory_space<vmem>>, %arg2: memref<256x128xbf16, #tpu.memory_space<vmem>>, %arg3: memref<1x128xf32, #tpu.memory_space<vmem>>, %arg4: memref<16x128xf32, #tpu.memory_space<vmem>>) attributes {dimension_semantics = [#tpu.dimension_semantics<parallel>], iteration_bounds = array<i64: 1>, scalar_prefetch = 0 : i64, scratch_operands = 0 : i64, tpu.core_type = #tpu.core_type<tc>, window_params = [{transform_indices = @transform_0, window_bounds = array<i64: 16, 256>}, {pipeline_mode = #tpu.pipeline_mode<synchronous>, transform_indices = @transform_1, window_bounds = array<i64: 256, 128>}, {pipeline_mode = #tpu.pipeline_mode<synchronous>, transform_indices = @transform_2, window_bounds = array<i64: 1, 128>}, {transform_indices = @transform_3, window_bounds = array<i64: 16, 128>}]} {
    %c0 = arith.constant 0 : index
    %c0_0 = arith.constant 0 : index
    %0 = vector.load %arg1[%c0, %c0_0] : memref<16x256xf32, #tpu.memory_space<vmem>>, vector<16x256xf32>
    %1 = arith.truncf %0 : vector<16x256xf32> to vector<16x256xbf16>
    %c0_1 = arith.constant 0 : index
    %c0_2 = arith.constant 0 : index
    %2 = vector.load %arg2[%c0_1, %c0_2] : memref<256x128xbf16, #tpu.memory_space<vmem>>, vector<256x128xbf16>
    %cst = arith.constant dense<0.000000e+00> : vector<16x128xf32>
    %3 = tpu.matmul %1, %2, %cst {dimension_numbers = #tpu.dot_dimension_numbers<[1], [0], [0], [1], [0, 0, 1, 1], [], []>} : vector<16x256xbf16>, vector<256x128xbf16>, vector<16x128xf32> -> vector<16x128xf32>
    %c0_3 = arith.constant 0 : index
    %c0_4 = arith.constant 0 : index
    %4 = vector.load %arg3[%c0_3, %c0_4] : memref<1x128xf32, #tpu.memory_space<vmem>>, vector<1x128xf32>
    %5 = vector.broadcast %4 : vector<1x128xf32> to vector<16x128xf32>
    %6 = arith.addf %3, %5 : vector<16x128xf32>
    %c0_5 = arith.constant 0 : index
    %c0_6 = arith.constant 0 : index
    %7 = vector.load %arg4[%c0_5, %c0_6] : memref<16x128xf32, #tpu.memory_space<vmem>>, vector<16x128xf32>
    tpu.vector_store %arg4[%c0_5, %c0_6], %6 {strides = array<i32>} : memref<16x128xf32, #tpu.memory_space<vmem>>, vector<16x128xf32>,
    return
  }
  func.func @transform_0(%arg0: i32) -> (i32, i32) {
    %c0_i32 = arith.constant 0 : i32
    %c0_i32_0 = arith.constant 0 : i32
    return %arg0, %c0_i32 : i32, i32
  }
  func.func @transform_1(%arg0: i32) -> (i32, i32) {
    %c0_i32 = arith.constant 0 : i32
    %c0_i32_0 = arith.constant 0 : i32
    %c0_i32_1 = arith.constant 0 : i32
    return %c0_i32, %c0_i32_0 : i32, i32
  }
  func.func @transform_2(%arg0: i32) -> (i32, i32) {
    %c0_i32 = arith.constant 0 : i32
    %c0_i32_0 = arith.constant 0 : i32
    %c0_i32_1 = arith.constant 0 : i32
    return %c0_i32, %c0_i32_0 : i32, i32
  }
  func.func @transform_3(%arg0: i32) -> (i32, i32) {
    %c0_i32 = arith.constant 0 : i32
    %c0_i32_0 = arith.constant 0 : i32
    return %arg0, %c0_i32 : i32, i32
  }
}

</mosaic_0001>

<llo_original>
// kernel: vision_proj.1
$region0: #{vision_proj.1}
  #allocation0 [shape = 'u32[]', space=smem, size = 0x4, offset = 0x4, fixed_abs, tag = 'smem constant byte address 0x4 - core index']
  #allocation1 [shape = 'u32[144,128]{1,0:T(1,128)}', space=vmem, size = 0x12000, scoped, tag = 'internal scratch']
  %s0 = inlined_call_operand.vmem [shape: f32[16,256], index: 0, kind: input, shape index: {}]
  %s1 = inlined_call_operand.vmem [shape: bf16[256,128], index: 1, kind: input, shape index: {}]
  %s2 = inlined_call_operand.vmem [shape: f32[1,128], index: 2, kind: input, shape index: {}]
  %s3 = inlined_call_operand.hbm [shape: f32[16,128], index: 3, kind: output, shape index: {}]
  %s4 = sld [smem:[#allocation0]]
  $region22: #{vision_proj.1} parent=0
    _
  %s6 = ssub.s32 1, %s4
  %s7 = scalar_select 0, %s6, %s4
  $region1: #{vision_proj.1} parent=0
    #allocation2 [shape = 'u8[8192]{0}', space=vmem, size = 0x2000, scoped, tag = 'output window, operand 0, single buffered']
    #allocation3 [shape = 's32[1]{0}', space=sflag, size = 0x4, scoped, tag = 'scoped memory for vision_proj.1']
    %8 = vsyncpa [#allocation3], 0
    // Predicated region
    $region2: #{vision_proj.1} parent=1 // pred_check
      _
    $region3: #{vision_proj.1} parent=1 // pred_check_branch
      %10 = sbr.rel (0) target = $region5
    $region4: #{vision_proj.1} parent=1 // pred_region
      _
    $region5: #{vision_proj.1} parent=1 // pred_fallthru
      _
    // Predicated region
    $region6: #{vision_proj.1} parent=1 // pred_check
      _
    $region7: #{vision_proj.1} parent=1 // pred_check_branch
      %12 = sbr.rel (0) target = $region9
    $region8: #{vision_proj.1} parent=1 // pred_region
      _
    $region9: #{vision_proj.1} parent=1 // pred_fallthru
      _
    // Predicated region
    $region10: #{vision_proj.1} parent=1 // pred_check
      _
    $region11: #{vision_proj.1} parent=1 // pred_check_branch
      %14 = sbr.rel (0) target = $region13
    $region12: #{vision_proj.1} parent=1 // pred_region
      _
    $region13: #{vision_proj.1} parent=1 // pred_fallthru
      _
    %v16 = vld [vmem:[%s0] sm:$0xff]
    %v17 = vld [vmem:[%s0 + $0x8] sm:$0xff]
    %v18 = vld [vmem:[%s0 + $0x10] sm:$0xff]
    %v19 = vld [vmem:[%s0 + $0x18] sm:$0xff]
    %v20 = vpack.c.bf16 %v18, %v16
    %v21 = vpack.c.bf16 %v19, %v17
    %v22 = vld [vmem:[%s1] sm:$0xf]
    %v23 = vld [vmem:[%s1 + $0x4] sm:$0xf]
    %v24 = vld [vmem:[%s1 + $0x8] sm:$0xf]
    %v25 = vld [vmem:[%s1 + $0xc] sm:$0xf]
    %v26 = vld [vmem:[%s1 + $0x10] sm:$0xf]
    %v27 = vld [vmem:[%s1 + $0x14] sm:$0xf]
    %v28 = vld [vmem:[%s1 + $0x18] sm:$0xf]
    %v29 = vld [vmem:[%s1 + $0x1c] sm:$0xf]
    %v30 = vld [vmem:[%s1 + $0x20] sm:$0xf]
    %v31 = vld [vmem:[%s1 + $0x24] sm:$0xf]
    %v32 = vld [vmem:[%s1 + $0x28] sm:$0xf]
    %v33 = vld [vmem:[%s1 + $0x2c] sm:$0xf]
    %v34 = vld [vmem:[%s1 + $0x30] sm:$0xf]
    %v35 = vld [vmem:[%s1 + $0x34] sm:$0xf]
    %v36 = vld [vmem:[%s1 + $0x38] sm:$0xf]
    %v37 = vld [vmem:[%s1 + $0x3c] sm:$0xf]
    %v38 = vld [vmem:[%s1 + $0x40] sm:$0xf]
    %v39 = vld [vmem:[%s1 + $0x44] sm:$0xf]
    %v40 = vld [vmem:[%s1 + $0x48] sm:$0xf]
    %v41 = vld [vmem:[%s1 + $0x4c] sm:$0xf]
    %v42 = vld [vmem:[%s1 + $0x50] sm:$0xf]
    %v43 = vld [vmem:[%s1 + $0x54] sm:$0xf]
    %v44 = vld [vmem:[%s1 + $0x58] sm:$0xf]
    %v45 = vld [vmem:[%s1 + $0x5c] sm:$0xf]
    %v46 = vld [vmem:[%s1 + $0x60] sm:$0xf]
    %v47 = vld [vmem:[%s1 + $0x64] sm:$0xf]
    %v48 = vld [vmem:[%s1 + $0x68] sm:$0xf]
    %v49 = vld [vmem:[%s1 + $0x6c] sm:$0xf]
    %v50 = vld [vmem:[%s1 + $0x70] sm:$0xf]
    %v51 = vld [vmem:[%s1 + $0x74] sm:$0xf]
    %v52 = vld [vmem:[%s1 + $0x78] sm:$0xf]
    %v53 = vld [vmem:[%s1 + $0x7c] sm:$0xf]
    %v54 = vld [vmem:[%s2] sm:$0x1]
    %v56 = vlaneseq
    %v57 = vshrl.u32 %v56, 7
    %v58 = vsub.s32 0, %v57
    %v59 = vrot.slane %v54, %v58
    %v93 = vunpack.c.l.b16 %v22
    %v94 = vunpack.c.l.b16 %v23
    %v95 = vunpack.c.l.b16 %v24
    %v96 = vunpack.c.l.b16 %v25
    %v97 = vunpack.c.l.b16 %v26
    %v98 = vunpack.c.l.b16 %v27
    %v99 = vunpack.c.l.b16 %v28
    %v100 = vunpack.c.l.b16 %v29
    %v101 = vunpack.c.l.b16 %v30
    %v102 = vunpack.c.l.b16 %v31
    %v103 = vunpack.c.l.b16 %v32
    %v104 = vunpack.c.l.b16 %v33
    %v105 = vunpack.c.l.b16 %v34
    %v106 = vunpack.c.l.b16 %v35
    %v107 = vunpack.c.l.b16 %v36
    %v108 = vunpack.c.l.b16 %v37
    %v109 = vunpack.c.l.b16 %v38
    %v110 = vunpack.c.l.b16 %v39
    %v111 = vunpack.c.l.b16 %v40
    %v112 = vunpack.c.l.b16 %v41
    %v113 = vunpack.c.l.b16 %v42
    %v114 = vunpack.c.l.b16 %v43
    %v115 = vunpack.c.l.b16 %v44
    %v116 = vunpack.c.l.b16 %v45
    %v117 = vunpack.c.l.b16 %v46
    %v118 = vunpack.c.l.b16 %v47
    %v119 = vunpack.c.l.b16 %v48
    %v120 = vunpack.c.l.b16 %v49
    %v121 = vunpack.c.l.b16 %v50
    %v122 = vunpack.c.l.b16 %v51
    %v123 = vunpack.c.l.b16 %v52
    %v124 = vunpack.c.l.b16 %v53
    %v125 = vpack.c.b16 %v94, %v93
    %v126 = vpack.c.b16 %v96, %v95
    %v127 = vpack.c.b16 %v98, %v97
    %v128 = vpack.c.b16 %v100, %v99
    %v129 = vpack.c.b16 %v102, %v101
    %v130 = vpack.c.b16 %v104, %v103
    %v131 = vpack.c.b16 %v106, %v105
    %v132 = vpack.c.b16 %v108, %v107
    %v133 = vpack.c.b16 %v110, %v109
    %v134 = vpack.c.b16 %v112, %v111
    %v135 = vpack.c.b16 %v114, %v113
    %v136 = vpack.c.b16 %v116, %v115
    %v137 = vpack.c.b16 %v118, %v117
    %v138 = vpack.c.b16 %v120, %v119
    %v139 = vpack.c.b16 %v122, %v121
    %v140 = vpack.c.b16 %v124, %v123
    %157 = vmatprep.subr.bf16.mxu0 0
    %158 = vmatpush1.bf16.msra.mxu0 %v125
    %159 = vmatprep.subr.bf16.mxu0 0
    %160 = vmatpush1.bf16.msra.mxu0 %v126
    %161 = vmatprep.subr.bf16.mxu0 0
    %162 = vmatpush1.bf16.msra.mxu0 %v127
    %163 = vmatprep.subr.bf16.mxu0 0
    %164 = vmatpush1.bf16.msra.mxu0 %v128
    %165 = vmatprep.subr.bf16.mxu0 0
    %166 = vmatpush1.bf16.msra.mxu0 %v129
    %167 = vmatprep.subr.bf16.mxu0 0
    %168 = vmatpush1.bf16.msra.mxu0 %v130
    %169 = vmatprep.subr.bf16.mxu0 0
    %170 = vmatpush1.bf16.msra.mxu0 %v131
    %171 = vmatprep.subr.bf16.mxu0 0
    %172 = vmatpush1.bf16.msra.mxu0 %v132
    %173 = vmatprep.subr.bf16.mxu0 0
    %174 = vmatpush1.bf16.msra.mxu0 %v133
    %175 = vmatprep.subr.bf16.mxu0 0
    %176 = vmatpush1.bf16.msra.mxu0 %v134
    %177 = vmatprep.subr.bf16.mxu0 0
    %178 = vmatpush1.bf16.msra.mxu0 %v135
    %179 = vmatprep.subr.bf16.mxu0 0
    %180 = vmatpush1.bf16.msra.mxu0 %v136
    %181 = vmatprep.subr.bf16.mxu0 0
    %182 = vmatpush1.bf16.msra.mxu0 %v137
    %183 = vmatprep.subr.bf16.mxu0 0
    %184 = vmatpush1.bf16.msra.mxu0 %v138
    %185 = vmatprep.subr.bf16.mxu0 0
    %186 = vmatpush1.bf16.msra.mxu0 %v139
    %187 = vmatprep.subr.bf16.mxu0 0
    %188 = vmatpush1.bf16.msra.mxu0 %v140
    %189 = vmatprep.mubr.bf16.mxu0 %v21
    %190 = vmatmul.mubr.bf16.gmra.mrb[0].mxu0 %v20
    %v191 = vpop.f32.mrb[0].mxu0
    %v192 = vadd.f32 %v59, %v191
    %v193 = vpop.f32.mrb[0].mxu0
    %v194 = vpop.f32.mrb[0].mxu0
    %v195 = vadd.f32 %v59, %v194
    %v196 = vpop.f32.mrb[0].mxu0
    %197 = vdwg.mxu0
    %198 = vst [vmem:[#allocation2] sm:$0xff] %v192
    %199 = vst [vmem:[#allocation2 + $0x8] sm:$0xff] %v195
    // Predicated region
    $region14: #{vision_proj.1} parent=1 // pred_check
      _
    $region15: #{vision_proj.1} parent=1 // pred_check_branch
      %201 = sbr.rel (0) target = $region17
    $region16: #{vision_proj.1} parent=1 // pred_region
      %s203 = ssub.s32 256, 256
      %204 = vsyncadd [#allocation3], %s203
      %s205 = sshll.u32 [#allocation2], 4
      %s206 = int_to_ptr.vmem [resolvable:$true] %s205
      %211 = dma.vmem_to_hbm [thread:$0]  %s206, 256, %s3, [#allocation3], 128, 128, 8
    $region17: #{vision_proj.1} parent=1 // pred_fallthru
      _
    // Predicated region
    $region18: #{vision_proj.1} parent=1 // pred_check
      _
    $region19: #{vision_proj.1} parent=1 // pred_check_branch
      %213 = sbr.rel (0) target = $region21
    $region20: #{vision_proj.1} parent=1 // pred_region
      %214 = dma.done [#allocation3], 256
    $region21: #{vision_proj.1} parent=1 // pred_fallthru
      _
    %215 = vsyncpa [#allocation3], 1

</llo_original>
